<compile_context>
chip_gen: v6e
topology: v6e:2x2x1
jax: 0.10.0
libtpu: 0.0.40
codegen_flags: <defaults>
</compile_context>

<pallas_src>
import functools

import jax
import jax.numpy as jnp
from jax import lax
from jax.experimental import pallas as pl
from jax.experimental.pallas import tpu as pltpu


def _knn_kernel(q_ref, t_ref, lbl_ref, out_ref, carry_sims, carry_keys, *,
                nb_knn, max_k, k_pad, tn, n_valid, inv_temp, num_classes_pad,
                label_bits):
    j = pl.program_id(1)
    nj = pl.num_programs(1)
    tb = q_ref.shape[0]
    span = 1 << label_bits
    int_max = jnp.int32(2**31 - 1)

    # Fresh query tile: reset the running top-k carry.
    @pl.when(j == 0)
    def _init():
        carry_sims[...] = jnp.full((tb, k_pad), -jnp.inf, dtype=jnp.float32)
        carry_keys[...] = jnp.zeros((tb, k_pad), dtype=jnp.int32)

    # [tb, tn] similarity tile on the MXU (bf16 x bf16 -> f32 accumulate).
    sims = jnp.dot(q_ref[...], t_ref[...], preferred_element_type=jnp.float32)

    col = lax.broadcasted_iota(jnp.int32, (1, tn), 1)
    if n_valid is not None:
        # Padded train columns can never be selected.
        sims = jnp.where(j * tn + col < n_valid, sims, -jnp.inf)

    # Packed tie-break/label key: key = pool_lane * 2^label_bits + label.
    # Carry sits at pool lanes [0, k_pad) so earlier (lower global index)
    # candidates win exact-value ties, like lax.top_k / torch.topk.
    tile_keys = jnp.broadcast_to((col + k_pad) * span + lbl_ref[...], (tb, tn))

    cand = jnp.concatenate([carry_sims[...], sims], axis=-1)        # [tb, k_pad+tn]
    keys = jnp.concatenate([carry_keys[...], tile_keys], axis=-1)   # [tb, k_pad+tn]

    # TODO(synk): for very large max_k (~100+) a hierarchical per-128-lane-chunk
    # select (or lax.fori_loop with the pool in scratch) would cut the scanned
    # width per round; max_k <= 128 is unrolled here.
    sel_sims = []   # descending order by construction (== sorted topk)
    sel_lbls = []
    for r in range(max_k):  # max_k is small and static
        m = jnp.max(cand, axis=-1, keepdims=True)                               # XLU
        kmin = jnp.min(jnp.where(cand == m, keys, int_max), axis=-1,
                       keepdims=True)                                           # XLU
        lbl = jnp.bitwise_and(kmin, span - 1)                                   # VPU
        sel_sims.append(m)
        sel_lbls.append(lbl)
        # Carry for the next train tile (slot r of the 128-wide carry).
        carry_sims[:, r:r + 1] = m
        carry_keys[:, r:r + 1] = lbl + r * span
        # Knock out the winner (keys are unique per pool lane).
        cand = jnp.where(keys == kmin, -jnp.inf, cand)

    # After the last bank tile: softmax(topk / T) + one-hot weighted vote,
    # emitted for every requested k (sum over the first k sorted neighbors).
    @pl.when(j == nj - 1)
    def _finalize():
        m0 = sel_sims[0]
        e = [jnp.exp((s - m0) * inv_temp) for s in sel_sims]   # stable softmax
        denom = e[0]
        for r in range(1, max_k):
            denom = denom + e[r]
        inv_denom = pl.reciprocal(denom, approx=True)          # EUP, ~free
        cls = lax.broadcasted_iota(jnp.int32, (tb, num_classes_pad), 1)
        acc = jnp.zeros((tb, num_classes_pad), dtype=jnp.float32)
        k_to_slot = {k: i for i, k in enumerate(nb_knn)}
        for r in range(max_k):
            w = e[r] * inv_denom                               # [tb, 1]
            acc = acc + w * (cls == sel_lbls[r]).astype(jnp.float32)
            if (r + 1) in k_to_slot:
                out_ref[k_to_slot[r + 1]] = acc


def _round_up(x, m):
    return ((x + m - 1) // m) * m


def _largest_tile(total, unit, cap):
    """Largest divisor of `total` that is a multiple of `unit` and <= cap."""
    best = None
    t = unit
    while t <= min(total, cap):
        if total % t == 0:
            best = t
        t += unit
    return best if best is not None else total


def knn_forward(features, train_features_T, train_labels, *, nb_knn, T,
                num_classes, tb=None, tn=None, compute_dtype=jnp.bfloat16):
    features = jnp.asarray(features)
    train_features_T = jnp.asarray(train_features_T)
    labels = jnp.asarray(train_labels, jnp.int32).reshape(1, -1)

    B, D = features.shape
    Dt, N = train_features_T.shape
    assert D == Dt, (D, Dt)
    assert labels.shape == (1, N)

    nb_knn = tuple(int(k) for k in nb_knn)
    n_k = len(nb_knn)
    max_k = max(nb_knn)
    assert 1 <= min(nb_knn) and max_k <= 128, "max_k must be in [1, 128]"
    assert N >= max_k, "need at least max_k train samples"

    k_pad = 128                                   # carry width (full lane group)
    num_classes = int(num_classes)
    c_pad = _round_up(num_classes, 128)           # lane-dense output (no vst.msk)
    label_bits = max(1, (num_classes - 1).bit_length())

    # Tile defaults: keep D full on the contraction; tb multiple of 8 (sublanes,
    # cap 256 so the train bank is re-streamed fewer times); tn multiple of 128.
    if tb is None:
        b8 = _round_up(B, 8)
        tb = _largest_tile(b8, 8, 256)
        if b8 // tb < 2 and tb % 16 == 0:
            tb //= 2                              # keep >=2 query tiles (v7x 2 TCs)
    B_pad = _round_up(B, tb)
    if tn is None:
        n128 = _round_up(N, 128)
        tn = _largest_tile(n128, 128, 1024)
    N_pad = _round_up(N, tn)
    assert B_pad % tb == 0 and tb % 8 == 0
    assert N_pad % tn == 0 and tn % 128 == 0
    assert (k_pad + tn) * (1 << label_bits) < 2**31, "packed key overflow"

    if B_pad != B:
        features = jnp.pad(features, ((0, B_pad - B), (0, 0)))
    if N_pad != N:
        train_features_T = jnp.pad(train_features_T, ((0, 0), (0, N_pad - N)))
        labels = jnp.pad(labels, ((0, 0), (0, N_pad - N)))

    # bf16 MXU path (f32 accumulate inside the kernel); halves bank DMA bytes.
    features = features.astype(compute_dtype)
    train_features_T = train_features_T.astype(compute_dtype)

    kernel = functools.partial(
        _knn_kernel, nb_knn=nb_knn, max_k=max_k, k_pad=k_pad, tn=tn,
        n_valid=(N if N_pad != N else None), inv_temp=float(1.0 / T),
        num_classes_pad=c_pad, label_bits=label_bits)

    out = pl.pallas_call(
        kernel,
        out_shape=jax.ShapeDtypeStruct((n_k, B_pad, c_pad), jnp.float32),
        grid_spec=pltpu.PrefetchScalarGridSpec(
            num_scalar_prefetch=0,
            grid=(B_pad // tb, N_pad // tn),      # bank (streaming) axis innermost
            in_specs=[
                pl.BlockSpec((tb, D), lambda i, j: (i, 0)),   # queries (bf16)
                pl.BlockSpec((D, tn), lambda i, j: (0, j)),   # train bank (already .T)
                pl.BlockSpec((1, tn), lambda i, j: (0, j)),   # train labels
            ],
            out_specs=pl.BlockSpec((n_k, tb, c_pad), lambda i, j: (0, i, 0)),
            scratch_shapes=[
                pltpu.VMEM((tb, k_pad), jnp.float32),         # top-k sim carry
                pltpu.VMEM((tb, k_pad), jnp.int32),           # packed lane/label carry
            ],
        ),
        compiler_params=pltpu.CompilerParams(
            dimension_semantics=("parallel", "arbitrary"),
            vmem_limit_bytes=48 * 1024 * 1024,    # safe on v5e/v6e/v7x at these tiles
        ),
    )(features, train_features_T, labels)

    return out[:, :B, :num_classes]


class KnnModule:
    """JAX/Pallas port of the DINO-style KnnModule (single-process path)."""
    # TODO(synk): the torch.distributed broadcast/gather exchange of per-rank
    # test features is not translated; only the non-distributed
    # compute_neighbors path (global_size == 1) is implemented.

    def __init__(self, train_features, train_labels, nb_knn, T,
                 num_classes=1000, tb=None, tn=None, compute_dtype=jnp.bfloat16):
        self.train_features_rank_T = jnp.asarray(train_features, jnp.float32).T  # [D, N]
        self.candidates = jnp.asarray(train_labels, jnp.int32).reshape(1, -1)    # [1, N]
        self.nb_knn = tuple(int(k) for k in nb_knn)
        self.max_k = max(self.nb_knn)
        self.T = float(T)
        self.num_classes = int(num_classes)
        self._tb, self._tn = tb, tn
        self._compute_dtype = compute_dtype

    def __call__(self, features_rank):
        assert all(k <= self.max_k for k in self.nb_knn)
        probas = knn_forward(
            features_rank, self.train_features_rank_T, self.candidates,
            nb_knn=self.nb_knn, T=self.T, num_classes=self.num_classes,
            tb=self._tb, tn=self._tn, compute_dtype=self._compute_dtype)
        return {k: probas[i] for i, k in enumerate(self.nb_knn)}


def knn_reference(features, train_features_T, train_labels, nb_knn, T, num_classes):
    """Pure-JAX reference for correctness checking."""
    sims = jnp.dot(features.astype(jnp.float32), train_features_T.astype(jnp.float32),
                   precision=lax.Precision.HIGHEST)
    max_k = max(nb_knn)
    topk_sims, idx = lax.top_k(sims, max_k)
    neighbors = jnp.reshape(train_labels, (-1,))[idx]
    w = jax.nn.softmax(topk_sims / T, axis=1)
    voted = jax.nn.one_hot(neighbors, num_classes, dtype=jnp.float32) * w[:, :, None]
    return {k: jnp.sum(voted[:, :k, :], axis=1) for k in nb_knn}


def _check(B, D, N, C, nb_knn, T, tb, tn, seed):
    key = jax.random.PRNGKey(seed)
    kq, kb, kl = jax.random.split(key, 3)
    train_features = jax.random.normal(kb, (N, D), dtype=jnp.float32)
    train_labels = jax.random.randint(kl, (N,), 0, C, dtype=jnp.int32)
    features = jax.random.normal(kq, (B, D), dtype=jnp.float32)

    knn = KnnModule(train_features, train_labels, nb_knn=nb_knn, T=T,
                    num_classes=C, tb=tb, tn=tn)
    probas = knn(features)
    jax.block_until_ready(probas)

    # Reference on the same bf16-rounded inputs the kernel consumes.
    feats_bf = features.astype(jnp.bfloat16).astype(jnp.float32)
    bank_bf = knn.train_features_rank_T.astype(jnp.bfloat16).astype(jnp.float32)
    ref = knn_reference(feats_bf, bank_bf, train_labels, nb_knn, T, C)
    for k in nb_knn:
        assert probas[k].shape == (B, C), probas[k].shape
        err = float(jnp.max(jnp.abs(probas[k] - ref[k])))
        assert err < 2e-2, f"B={B} N={N} C={C} k={k}: max abs err {err}"


if __name__ == "__main__":
    # Small tiles on purpose so the demo exercises the multi-tile streaming
    # top-k path: grid = (B//8, N//128) = (2, 4).
    _check(B=16, D=64, N=512, C=128, nb_knn=(1, 3, 5), T=0.1, tb=8, tn=128, seed=0)
    # Ragged shapes: exercises query padding, train-column -inf masking and
    # class-dim padding (100 -> 128), with default tile selection.
    _check(B=10, D=64, N=500, C=100, nb_knn=(1, 5), T=0.07, tb=None, tn=None, seed=0)
    print("KERNEL_OK")
</pallas_src>

<mosaic_0001>
module attributes {stable_mosaic.version = 11 : i64} {
  func.func @_knn_kernel(%arg0: i32, %arg1: i32, %arg2: memref<8x64xbf16, #tpu.memory_space<vmem>>, %arg3: memref<64x128xbf16, #tpu.memory_space<vmem>>, %arg4: memref<1x128xi32, #tpu.memory_space<vmem>>, %arg5: memref<3x8x128xf32, #tpu.memory_space<vmem>>, %arg6: memref<8x128xf32, #tpu.memory_space<vmem>>, %arg7: memref<8x128xi32, #tpu.memory_space<vmem>>) attributes {dimension_semantics = [#tpu.dimension_semantics<parallel>, #tpu.dimension_semantics<arbitrary>], iteration_bounds = array<i64: 2, 4>, scalar_prefetch = 0 : i64, scratch_operands = 2 : i64, tpu.core_type = #tpu.core_type<tc>, window_params = [{transform_indices = @transform_0, window_bounds = array<i64: 8, 64>}, {transform_indices = @transform_1, window_bounds = array<i64: 64, 128>}, {transform_indices = @transform_2, window_bounds = array<i64: 1, 128>}, {transform_indices = @transform_3, window_bounds = array<i64: 3, 8, 128>}]} {
    %c0_i32 = arith.constant 0 : i32
    %0 = arith.cmpi eq, %arg1, %c0_i32 : i32
    %1 = arith.extui %0 : i1 to i32
    %c0_i32_0 = arith.constant 0 : i32
    %2 = arith.cmpi ne, %1, %c0_i32_0 : i32
    scf.if %2 {
      %cst_52 = arith.constant 0xFF800000 : f32
      %108 = vector.broadcast %cst_52 : f32 to vector<8x128xf32>
      %c0_53 = arith.constant 0 : index
      %c0_54 = arith.constant 0 : index
      %109 = vector.load %arg6[%c0_53, %c0_54] : memref<8x128xf32, #tpu.memory_space<vmem>>, vector<8x128xf32>
      tpu.vector_store %arg6[%c0_53, %c0_54], %108 {strides = array<i32>} : memref<8x128xf32, #tpu.memory_space<vmem>>, vector<8x128xf32>,
      %c0_i32_55 = arith.constant 0 : i32
      %110 = vector.broadcast %c0_i32_55 : i32 to vector<8x128xi32>
      %c0_56 = arith.constant 0 : index
      %c0_57 = arith.constant 0 : index
      %111 = vector.load %arg7[%c0_56, %c0_57] : memref<8x128xi32, #tpu.memory_space<vmem>>, vector<8x128xi32>
      tpu.vector_store %arg7[%c0_56, %c0_57], %110 {strides = array<i32>} : memref<8x128xi32, #tpu.memory_space<vmem>>, vector<8x128xi32>,
    } else {
    }
    %c0 = arith.constant 0 : index
    %c0_1 = arith.constant 0 : index
    %3 = vector.load %arg2[%c0, %c0_1] : memref<8x64xbf16, #tpu.memory_space<vmem>>, vector<8x64xbf16>
    %c0_2 = arith.constant 0 : index
    %c0_3 = arith.constant 0 : index
    %4 = vector.load %arg3[%c0_2, %c0_3] : memref<64x128xbf16, #tpu.memory_space<vmem>>, vector<64x128xbf16>
    %cst = arith.constant dense<0.000000e+00> : vector<8x128xf32>
    %5 = tpu.matmul %3, %4, %cst {dimension_numbers = #tpu.dot_dimension_numbers<[1], [0], [0], [1], [0, 0, 1, 1], [], []>} : vector<8x64xbf16>, vector<64x128xbf16>, vector<8x128xf32> -> vector<8x128xf32>
    %6 = tpu.iota {dimensions = array<i32: 1>} : vector<1x128xi32>
    %c128_i32 = arith.constant 128 : i32
    %7 = vector.broadcast %c128_i32 : i32 to vector<1x128xi32>
    %8 = arith.addi %6, %7 : vector<1x128xi32>
    %c128_i32_4 = arith.constant 128 : i32
    %9 = vector.broadcast %c128_i32_4 : i32 to vector<1x128xi32>
    %10 = arith.muli %8, %9 : vector<1x128xi32>
    %c0_5 = arith.constant 0 : index
    %c0_6 = arith.constant 0 : index
    %11 = vector.load %arg4[%c0_5, %c0_6] : memref<1x128xi32, #tpu.memory_space<vmem>>, vector<1x128xi32>
    %12 = arith.addi %10, %11 : vector<1x128xi32>
    %13 = vector.shape_cast %12 : vector<1x128xi32> to vector<1x128xi32>
    %14 = vector.broadcast %13 : vector<1x128xi32> to vector<8x128xi32>
    %c0_7 = arith.constant 0 : index
    %c0_8 = arith.constant 0 : index
    %15 = vector.load %arg6[%c0_7, %c0_8] : memref<8x128xf32, #tpu.memory_space<vmem>>, vector<8x128xf32>
    %16 = tpu.concatenate %15, %5 in 1 : vector<8x128xf32>, vector<8x128xf32> -> vector<8x256xf32>
    %c0_9 = arith.constant 0 : index
    %c0_10 = arith.constant 0 : index
    %17 = vector.load %arg7[%c0_9, %c0_10] : memref<8x128xi32, #tpu.memory_space<vmem>>, vector<8x128xi32>
    %18 = tpu.concatenate %17, %14 in 1 : vector<8x128xi32>, vector<8x128xi32> -> vector<8x256xi32>
    %cst_11 = arith.constant dense<0xFF800000> : vector<8xf32>
    %19 = vector.multi_reduction <maximumf>, %16, %cst_11 [1] : vector<8x256xf32> to vector<8xf32>
    %20 = vector.shape_cast %19 : vector<8xf32> to vector<8x1xf32>
    %21 = vector.broadcast %20 : vector<8x1xf32> to vector<8x256xf32>
    %22 = arith.cmpf oeq, %16, %21 : vector<8x256xf32>
    %c2147483647_i32 = arith.constant 2147483647 : i32
    %23 = vector.broadcast %c2147483647_i32 : i32 to vector<8x256xi32>
    %24 = arith.select %22, %18, %23 : vector<8x256xi1>, vector<8x256xi32>
    %cst_12 = arith.constant dense<2147483647> : vector<8xi32>
    %25 = vector.multi_reduction <minsi>, %24, %cst_12 [1] : vector<8x256xi32> to vector<8xi32>
    %26 = vector.shape_cast %25 : vector<8xi32> to vector<8x1xi32>
    %c127_i32 = arith.constant 127 : i32
    %27 = vector.broadcast %c127_i32 : i32 to vector<8x1xi32>
    %28 = arith.andi %26, %27 : vector<8x1xi32>
    %c0_13 = arith.constant 0 : index
    %c0_14 = arith.constant 0 : index
    %29 = vector.load %arg6[%c0_13, %c0_14] : memref<8x128xf32, #tpu.memory_space<vmem>>, vector<8x1xf32>
    tpu.vector_store %arg6[%c0_13, %c0_14], %20 {strides = array<i32>} : memref<8x128xf32, #tpu.memory_space<vmem>>, vector<8x1xf32>,
    %c0_i32_15 = arith.constant 0 : i32
    %30 = vector.broadcast %c0_i32_15 : i32 to vector<8x1xi32>
    %31 = arith.addi %28, %30 : vector<8x1xi32>
    %c0_16 = arith.constant 0 : index
    %c0_17 = arith.constant 0 : index
    %32 = vector.load %arg7[%c0_16, %c0_17] : memref<8x128xi32, #tpu.memory_space<vmem>>, vector<8x1xi32>
    tpu.vector_store %arg7[%c0_16, %c0_17], %31 {strides = array<i32>} : memref<8x128xi32, #tpu.memory_space<vmem>>, vector<8x1xi32>,
    %33 = vector.broadcast %26 : vector<8x1xi32> to vector<8x256xi32>
    %34 = arith.cmpi eq, %18, %33 : vector<8x256xi32>
    %cst_18 = arith.constant 0xFF800000 : f32
    %35 = vector.broadcast %cst_18 : f32 to vector<8x256xf32>
    %36 = arith.select %34, %35, %16 : vector<8x256xi1>, vector<8x256xf32>
    %cst_19 = arith.constant dense<0xFF800000> : vector<8xf32>
    %37 = vector.multi_reduction <maximumf>, %36, %cst_19 [1] : vector<8x256xf32> to vector<8xf32>
    %38 = vector.shape_cast %37 : vector<8xf32> to vector<8x1xf32>
    %39 = vector.broadcast %38 : vector<8x1xf32> to vector<8x256xf32>
    %40 = arith.cmpf oeq, %36, %39 : vector<8x256xf32>
    %c2147483647_i32_20 = arith.constant 2147483647 : i32
    %41 = vector.broadcast %c2147483647_i32_20 : i32 to vector<8x256xi32>
    %42 = arith.select %40, %18, %41 : vector<8x256xi1>, vector<8x256xi32>
    %cst_21 = arith.constant dense<2147483647> : vector<8xi32>
    %43 = vector.multi_reduction <minsi>, %42, %cst_21 [1] : vector<8x256xi32> to vector<8xi32>
    %44 = vector.shape_cast %43 : vector<8xi32> to vector<8x1xi32>
    %c127_i32_22 = arith.constant 127 : i32
    %45 = vector.broadcast %c127_i32_22 : i32 to vector<8x1xi32>
    %46 = arith.andi %44, %45 : vector<8x1xi32>
    %c0_23 = arith.constant 0 : index
    %c1 = arith.constant 1 : index
    %47 = vector.load %arg6[%c0_23, %c1] : memref<8x128xf32, #tpu.memory_space<vmem>>, vector<8x1xf32>
    tpu.vector_store %arg6[%c0_23, %c1], %38 {strides = array<i32>} : memref<8x128xf32, #tpu.memory_space<vmem>>, vector<8x1xf32>,
    %c128_i32_24 = arith.constant 128 : i32
    %48 = vector.broadcast %c128_i32_24 : i32 to vector<8x1xi32>
    %49 = arith.addi %46, %48 : vector<8x1xi32>
    %c0_25 = arith.constant 0 : index
    %c1_26 = arith.constant 1 : index
    %50 = vector.load %arg7[%c0_25, %c1_26] : memref<8x128xi32, #tpu.memory_space<vmem>>, vector<8x1xi32>
    tpu.vector_store %arg7[%c0_25, %c1_26], %49 {strides = array<i32>} : memref<8x128xi32, #tpu.memory_space<vmem>>, vector<8x1xi32>,
    %51 = vector.broadcast %44 : vector<8x1xi32> to vector<8x256xi32>
    %52 = arith.cmpi eq, %18, %51 : vector<8x256xi32>
    %cst_27 = arith.constant 0xFF800000 : f32
    %53 = vector.broadcast %cst_27 : f32 to vector<8x256xf32>
    %54 = arith.select %52, %53, %36 : vector<8x256xi1>, vector<8x256xf32>
    %cst_28 = arith.constant dense<0xFF800000> : vector<8xf32>
    %55 = vector.multi_reduction <maximumf>, %54, %cst_28 [1] : vector<8x256xf32> to vector<8xf32>
    %56 = vector.shape_cast %55 : vector<8xf32> to vector<8x1xf32>
    %57 = vector.broadcast %56 : vector<8x1xf32> to vector<8x256xf32>
    %58 = arith.cmpf oeq, %54, %57 : vector<8x256xf32>
    %c2147483647_i32_29 = arith.constant 2147483647 : i32
    %59 = vector.broadcast %c2147483647_i32_29 : i32 to vector<8x256xi32>
    %60 = arith.select %58, %18, %59 : vector<8x256xi1>, vector<8x256xi32>
    %cst_30 = arith.constant dense<2147483647> : vector<8xi32>
    %61 = vector.multi_reduction <minsi>, %60, %cst_30 [1] : vector<8x256xi32> to vector<8xi32>
    %62 = vector.shape_cast %61 : vector<8xi32> to vector<8x1xi32>
    %c127_i32_31 = arith.constant 127 : i32
    %63 = vector.broadcast %c127_i32_31 : i32 to vector<8x1xi32>
    %64 = arith.andi %62, %63 : vector<8x1xi32>
    %c0_32 = arith.constant 0 : index
    %c2 = arith.constant 2 : index
    %65 = vector.load %arg6[%c0_32, %c2] : memref<8x128xf32, #tpu.memory_space<vmem>>, vector<8x1xf32>
    tpu.vector_store %arg6[%c0_32, %c2], %56 {strides = array<i32>} : memref<8x128xf32, #tpu.memory_space<vmem>>, vector<8x1xf32>,
    %c256_i32 = arith.constant 256 : i32
    %66 = vector.broadcast %c256_i32 : i32 to vector<8x1xi32>
    %67 = arith.addi %64, %66 : vector<8x1xi32>
    %c0_33 = arith.constant 0 : index
    %c2_34 = arith.constant 2 : index
    %68 = vector.load %arg7[%c0_33, %c2_34] : memref<8x128xi32, #tpu.memory_space<vmem>>, vector<8x1xi32>
    tpu.vector_store %arg7[%c0_33, %c2_34], %67 {strides = array<i32>} : memref<8x128xi32, #tpu.memory_space<vmem>>, vector<8x1xi32>,
    %69 = vector.broadcast %62 : vector<8x1xi32> to vector<8x256xi32>
    %70 = arith.cmpi eq, %18, %69 : vector<8x256xi32>
    %cst_35 = arith.constant 0xFF800000 : f32
    %71 = vector.broadcast %cst_35 : f32 to vector<8x256xf32>
    %72 = arith.select %70, %71, %54 : vector<8x256xi1>, vector<8x256xf32>
    %cst_36 = arith.constant dense<0xFF800000> : vector<8xf32>
    %73 = vector.multi_reduction <maximumf>, %72, %cst_36 [1] : vector<8x256xf32> to vector<8xf32>
    %74 = vector.shape_cast %73 : vector<8xf32> to vector<8x1xf32>
    %75 = vector.broadcast %74 : vector<8x1xf32> to vector<8x256xf32>
    %76 = arith.cmpf oeq, %72, %75 : vector<8x256xf32>
    %c2147483647_i32_37 = arith.constant 2147483647 : i32
    %77 = vector.broadcast %c2147483647_i32_37 : i32 to vector<8x256xi32>
    %78 = arith.select %76, %18, %77 : vector<8x256xi1>, vector<8x256xi32>
    %cst_38 = arith.constant dense<2147483647> : vector<8xi32>
    %79 = vector.multi_reduction <minsi>, %78, %cst_38 [1] : vector<8x256xi32> to vector<8xi32>
    %80 = vector.shape_cast %79 : vector<8xi32> to vector<8x1xi32>
    %c127_i32_39 = arith.constant 127 : i32
    %81 = vector.broadcast %c127_i32_39 : i32 to vector<8x1xi32>
    %82 = arith.andi %80, %81 : vector<8x1xi32>
    %c0_40 = arith.constant 0 : index
    %c3 = arith.constant 3 : index
    %83 = vector.load %arg6[%c0_40, %c3] : memref<8x128xf32, #tpu.memory_space<vmem>>, vector<8x1xf32>
    tpu.vector_store %arg6[%c0_40, %c3], %74 {strides = array<i32>} : memref<8x128xf32, #tpu.memory_space<vmem>>, vector<8x1xf32>,
    %c384_i32 = arith.constant 384 : i32
    %84 = vector.broadcast %c384_i32 : i32 to vector<8x1xi32>
    %85 = arith.addi %82, %84 : vector<8x1xi32>
    %c0_41 = arith.constant 0 : index
    %c3_42 = arith.constant 3 : index
    %86 = vector.load %arg7[%c0_41, %c3_42] : memref<8x128xi32, #tpu.memory_space<vmem>>, vector<8x1xi32>
    tpu.vector_store %arg7[%c0_41, %c3_42], %85 {strides = array<i32>} : memref<8x128xi32, #tpu.memory_space<vmem>>, vector<8x1xi32>,
    %87 = vector.broadcast %80 : vector<8x1xi32> to vector<8x256xi32>
    %88 = arith.cmpi eq, %18, %87 : vector<8x256xi32>
    %cst_43 = arith.constant 0xFF800000 : f32
    %89 = vector.broadcast %cst_43 : f32 to vector<8x256xf32>
    %90 = arith.select %88, %89, %72 : vector<8x256xi1>, vector<8x256xf32>
    %cst_44 = arith.constant dense<0xFF800000> : vector<8xf32>
    %91 = vector.multi_reduction <maximumf>, %90, %cst_44 [1] : vector<8x256xf32> to vector<8xf32>
    %92 = vector.shape_cast %91 : vector<8xf32> to vector<8x1xf32>
    %93 = vector.broadcast %92 : vector<8x1xf32> to vector<8x256xf32>
    %94 = arith.cmpf oeq, %90, %93 : vector<8x256xf32>
    %c2147483647_i32_45 = arith.constant 2147483647 : i32
    %95 = vector.broadcast %c2147483647_i32_45 : i32 to vector<8x256xi32>
    %96 = arith.select %94, %18, %95 : vector<8x256xi1>, vector<8x256xi32>
    %cst_46 = arith.constant dense<2147483647> : vector<8xi32>
    %97 = vector.multi_reduction <minsi>, %96, %cst_46 [1] : vector<8x256xi32> to vector<8xi32>
    %98 = vector.shape_cast %97 : vector<8xi32> to vector<8x1xi32>
    %c127_i32_47 = arith.constant 127 : i32
    %99 = vector.broadcast %c127_i32_47 : i32 to vector<8x1xi32>
    %100 = arith.andi %98, %99 : vector<8x1xi32>
    %c0_48 = arith.constant 0 : index
    %c4 = arith.constant 4 : index
    %101 = vector.load %arg6[%c0_48, %c4] : memref<8x128xf32, #tpu.memory_space<vmem>>, vector<8x1xf32>
    tpu.vector_store %arg6[%c0_48, %c4], %92 {strides = array<i32>} : memref<8x128xf32, #tpu.memory_space<vmem>>, vector<8x1xf32>,
    %c512_i32 = arith.constant 512 : i32
    %102 = vector.broadcast %c512_i32 : i32 to vector<8x1xi32>
    %103 = arith.addi %100, %102 : vector<8x1xi32>
    %c0_49 = arith.constant 0 : index
    %c4_50 = arith.constant 4 : index
    %104 = vector.load %arg7[%c0_49, %c4_50] : memref<8x128xi32, #tpu.memory_space<vmem>>, vector<8x1xi32>
    tpu.vector_store %arg7[%c0_49, %c4_50], %103 {strides = array<i32>} : memref<8x128xi32, #tpu.memory_space<vmem>>, vector<8x1xi32>,
    %c3_i32 = arith.constant 3 : i32
    %105 = arith.cmpi eq, %arg1, %c3_i32 : i32
    %106 = arith.extui %105 : i1 to i32
    %c0_i32_51 = arith.constant 0 : i32
    %107 = arith.cmpi ne, %106, %c0_i32_51 : i32
    scf.if %107 {
      %108 = arith.subf %20, %20 : vector<8x1xf32>
      %cst_52 = arith.constant 1.000000e+01 : f32
      %109 = vector.broadcast %cst_52 : f32 to vector<8x1xf32>
      %110 = arith.mulf %108, %109 : vector<8x1xf32>
      %111 = math.exp %110 : vector<8x1xf32>
      %112 = arith.subf %38, %20 : vector<8x1xf32>
      %cst_53 = arith.constant 1.000000e+01 : f32
      %113 = vector.broadcast %cst_53 : f32 to vector<8x1xf32>
      %114 = arith.mulf %112, %113 : vector<8x1xf32>
      %115 = math.exp %114 : vector<8x1xf32>
      %116 = arith.subf %56, %20 : vector<8x1xf32>
      %cst_54 = arith.constant 1.000000e+01 : f32
      %117 = vector.broadcast %cst_54 : f32 to vector<8x1xf32>
      %118 = arith.mulf %116, %117 : vector<8x1xf32>
      %119 = math.exp %118 : vector<8x1xf32>
      %120 = arith.subf %74, %20 : vector<8x1xf32>
      %cst_55 = arith.constant 1.000000e+01 : f32
      %121 = vector.broadcast %cst_55 : f32 to vector<8x1xf32>
      %122 = arith.mulf %120, %121 : vector<8x1xf32>
      %123 = math.exp %122 : vector<8x1xf32>
      %124 = arith.subf %92, %20 : vector<8x1xf32>
      %cst_56 = arith.constant 1.000000e+01 : f32
      %125 = vector.broadcast %cst_56 : f32 to vector<8x1xf32>
      %126 = arith.mulf %124, %125 : vector<8x1xf32>
      %127 = math.exp %126 : vector<8x1xf32>
      %128 = arith.addf %111, %115 : vector<8x1xf32>
      %129 = arith.addf %128, %119 : vector<8x1xf32>
      %130 = arith.addf %129, %123 : vector<8x1xf32>
      %131 = arith.addf %130, %127 : vector<8x1xf32>
      %132 = tpu.reciprocal %131 {approx = true} : vector<8x1xf32> -> vector<8x1xf32>
      %133 = tpu.iota {dimensions = array<i32: 1>} : vector<8x128xi32>
      %cst_57 = arith.constant 0.000000e+00 : f32
      %134 = vector.broadcast %cst_57 : f32 to vector<8x128xf32>
      %135 = arith.mulf %111, %132 : vector<8x1xf32>
      %136 = vector.broadcast %28 : vector<8x1xi32> to vector<8x128xi32>
      %137 = arith.cmpi eq, %133, %136 : vector<8x128xi32>
      %138 = arith.extui %137 : vector<8x128xi1> to vector<8x128xi32>
      %139 = arith.sitofp %138 : vector<8x128xi32> to vector<8x128xf32>
      %140 = vector.broadcast %135 : vector<8x1xf32> to vector<8x128xf32>
      %141 = arith.mulf %140, %139 : vector<8x128xf32>
      %142 = arith.addf %134, %141 : vector<8x128xf32>
      %c0_58 = arith.constant 0 : index
      %c0_59 = arith.constant 0 : index
      %c0_60 = arith.constant 0 : index
      %143 = vector.load %arg5[%c0_58, %c0_59, %c0_60] : memref<3x8x128xf32, #tpu.memory_space<vmem>>, vector<1x8x128xf32>
      %144 = vector.shape_cast %143 : vector<1x8x128xf32> to vector<8x128xf32>
      %145 = vector.shape_cast %142 : vector<8x128xf32> to vector<1x8x128xf32>
      tpu.vector_store %arg5[%c0_58, %c0_59, %c0_60], %145 {strides = array<i32>} : memref<3x8x128xf32, #tpu.memory_space<vmem>>, vector<1x8x128xf32>,
      %146 = arith.mulf %115, %132 : vector<8x1xf32>
      %147 = vector.broadcast %46 : vector<8x1xi32> to vector<8x128xi32>
      %148 = arith.cmpi eq, %133, %147 : vector<8x128xi32>
      %149 = arith.extui %148 : vector<8x128xi1> to vector<8x128xi32>
      %150 = arith.sitofp %149 : vector<8x128xi32> to vector<8x128xf32>
      %151 = vector.broadcast %146 : vector<8x1xf32> to vector<8x128xf32>
      %152 = arith.mulf %151, %150 : vector<8x128xf32>
      %153 = arith.addf %142, %152 : vector<8x128xf32>
      %154 = arith.mulf %119, %132 : vector<8x1xf32>
      %155 = vector.broadcast %64 : vector<8x1xi32> to vector<8x128xi32>
      %156 = arith.cmpi eq, %133, %155 : vector<8x128xi32>
      %157 = arith.extui %156 : vector<8x128xi1> to vector<8x128xi32>
      %158 = arith.sitofp %157 : vector<8x128xi32> to vector<8x128xf32>
      %159 = vector.broadcast %154 : vector<8x1xf32> to vector<8x128xf32>
      %160 = arith.mulf %159, %158 : vector<8x128xf32>
      %161 = arith.addf %153, %160 : vector<8x128xf32>
      %c1_61 = arith.constant 1 : index
      %c0_62 = arith.constant 0 : index
      %c0_63 = arith.constant 0 : index
      %162 = vector.load %arg5[%c1_61, %c0_62, %c0_63] : memref<3x8x128xf32, #tpu.memory_space<vmem>>, vector<1x8x128xf32>
      %163 = vector.shape_cast %162 : vector<1x8x128xf32> to vector<8x128xf32>
      %164 = vector.shape_cast %161 : vector<8x128xf32> to vector<1x8x128xf32>
      tpu.vector_store %arg5[%c1_61, %c0_62, %c0_63], %164 {strides = array<i32>} : memref<3x8x128xf32, #tpu.memory_space<vmem>>, vector<1x8x128xf32>,
      %165 = arith.mulf %123, %132 : vector<8x1xf32>
      %166 = vector.broadcast %82 : vector<8x1xi32> to vector<8x128xi32>
      %167 = arith.cmpi eq, %133, %166 : vector<8x128xi32>
      %168 = arith.extui %167 : vector<8x128xi1> to vector<8x128xi32>
      %169 = arith.sitofp %168 : vector<8x128xi32> to vector<8x128xf32>
      %170 = vector.broadcast %165 : vector<8x1xf32> to vector<8x128xf32>
      %171 = arith.mulf %170, %169 : vector<8x128xf32>
      %172 = arith.addf %161, %171 : vector<8x128xf32>
      %173 = arith.mulf %127, %132 : vector<8x1xf32>
      %174 = vector.broadcast %100 : vector<8x1xi32> to vector<8x128xi32>
      %175 = arith.cmpi eq, %133, %174 : vector<8x128xi32>
      %176 = arith.extui %175 : vector<8x128xi1> to vector<8x128xi32>
      %177 = arith.sitofp %176 : vector<8x128xi32> to vector<8x128xf32>
      %178 = vector.broadcast %173 : vector<8x1xf32> to vector<8x128xf32>
      %179 = arith.mulf %178, %177 : vector<8x128xf32>
      %180 = arith.addf %172, %179 : vector<8x128xf32>
      %c2_64 = arith.constant 2 : index
      %c0_65 = arith.constant 0 : index
      %c0_66 = arith.constant 0 : index
      %181 = vector.load %arg5[%c2_64, %c0_65, %c0_66] : memref<3x8x128xf32, #tpu.memory_space<vmem>>, vector<1x8x128xf32>
      %182 = vector.shape_cast %181 : vector<1x8x128xf32> to vector<8x128xf32>
      %183 = vector.shape_cast %180 : vector<8x128xf32> to vector<1x8x128xf32>
      tpu.vector_store %arg5[%c2_64, %c0_65, %c0_66], %183 {strides = array<i32>} : memref<3x8x128xf32, #tpu.memory_space<vmem>>, vector<1x8x128xf32>,
    } else {
    }
    return
  }
  func.func @transform_0(%arg0: i32, %arg1: i32) -> (i32, i32) {
    %c0_i32 = arith.constant 0 : i32
    %c0_i32_0 = arith.constant 0 : i32
    return %arg0, %c0_i32 : i32, i32
  }
  func.func @transform_1(%arg0: i32, %arg1: i32) -> (i32, i32) {
    %c0_i32 = arith.constant 0 : i32
    %c0_i32_0 = arith.constant 0 : i32
    return %c0_i32, %arg1 : i32, i32
  }
  func.func @transform_2(%arg0: i32, %arg1: i32) -> (i32, i32) {
    %c0_i32 = arith.constant 0 : i32
    %c0_i32_0 = arith.constant 0 : i32
    return %c0_i32, %arg1 : i32, i32
  }
  func.func @transform_3(%arg0: i32, %arg1: i32) -> (i32, i32, i32) {
    %c0_i32 = arith.constant 0 : i32
    %c0_i32_0 = arith.constant 0 : i32
    %c0_i32_1 = arith.constant 0 : i32
    return %c0_i32, %arg0, %c0_i32_0 : i32, i32, i32
  }
}

</mosaic_0001>

<llo_original>
// kernel: tpu_custom_call.1
$region0: #{tpu_custom_call.1}
  #allocation0 [shape = 'u32[]', space=smem, size = 0x4, offset = 0x4, fixed_abs, tag = 'smem constant byte address 0x4 - core index']
  #allocation1 [shape = 'u32[144,128]{1,0:T(1,128)}', space=vmem, size = 0x12000, scoped, tag = 'internal scratch']
  #allocation2 [shape = 'f32[8,128]{1,0:T(8,128)}', space=vmem, size = 0x1000, scoped, tag = 'scratch operand']
  #allocation3 [shape = 's32[8,128]{1,0:T(8,128)}', space=vmem, size = 0x1000, scoped, tag = 'scratch operand']
  %s0 = inlined_call_operand.hbm [shape: bf16[16,64], index: 0, kind: input, shape index: {}]
  %s1 = inlined_call_operand.hbm [shape: bf16[64,512], index: 1, kind: input, shape index: {}]
  %s2 = inlined_call_operand.hbm [shape: s32[1,512], index: 2, kind: input, shape index: {}]
  %s3 = inlined_call_operand.hbm [shape: f32[3,16,128], index: 3, kind: output, shape index: {}]
  %s4 = sld [smem:[#allocation0]]
  $region65: #{tpu_custom_call.1} parent=0
    _
  %s6 = ssub.s32 1, %s4
  %s7 = scalar_select 0, %s6, %s4
  $region1: #{tpu_custom_call.1} parent=0
    #allocation4 [shape = 'u8[4096]{0}', space=vmem, size = 0x1000, scoped, tag = 'input window, operand 0']
    #allocation5 [shape = 's32[2]{0}', space=sflag, size = 0x8, scoped, tag = 'scoped memory for tpu_custom_call.1']
    #allocation6 [shape = 's32[2]{0}', space=sflag, size = 0x8, scoped, tag = 'scoped memory for tpu_custom_call.1']
    #allocation7 [shape = 'u8[32768]{0}', space=vmem, size = 0x8000, scoped, tag = 'input window, operand 1']
    #allocation8 [shape = 's32[2]{0}', space=sflag, size = 0x8, scoped, tag = 'scoped memory for tpu_custom_call.1']
    #allocation9 [shape = 'u8[1024]{0}', space=vmem, size = 0x400, scoped, tag = 'input window, operand 2']
    #allocation10 [shape = 'u8[24576]{0}', space=vmem, size = 0x6000, scoped, tag = 'output window, operand 0']
    %8 = vsyncpa [#allocation5], 0
    %s9 = scalar_lea.sflag [#allocation5], 1
    %10 = vsyncpa %s9, 0
    %11 = vsyncpa [#allocation8], 0
    %s12 = scalar_lea.sflag [#allocation8], 1
    %13 = vsyncpa %s12, 0
    %14 = vsyncpa [#allocation6], 0
    %s15 = scalar_lea.sflag [#allocation6], 1
    %16 = vsyncpa %s15, 0
    loop: start=0, step=1, limit=10
    $region2: #{tpu_custom_call.1} parent=1 // loop_pre_header
      _
    $region3: #{tpu_custom_call.1} parent=1 // loop_header
      %s18 = sphi 0, %s22
      %p19 = scmp.ge.s32.totalorder %s18, 10
      %s25 = sphi 0, %s37
      %s26 = sphi 0, %s33
      %s27 = sphi 0, %s25
      %s28 = sphi 0, %s26
      %s29 = sphi 0, %s27
      %s30 = sphi 0, %s28
      %s40 = sphi 0, %s42
      %s43 = sphi 0, %s40
      %s44 = sphi 0, %s43
      %s60 = sphi 0, %s44
      %s66 = sphi 0, %s68
      %s69 = sphi 0, %s66
      %s70 = sphi 0, %s69
      %s86 = sphi 0, %s70
      %s92 = sphi 0, %s94
      %s95 = sphi 0, %s92
      %s96 = sphi 0, %s95
      %s112 = sphi 0, %s96
      %s118 = sphi 0, %s120
      %s121 = sphi 0, %s118
      %s122 = sphi 0, %s121
      %s138 = sphi 0, %s122
    $region4: #{tpu_custom_call.1} parent=1 // loop_header_branch
      %21 = sbr.rel (%p19) target = $region8
    $region5: #{tpu_custom_call.1} parent=1 // loop_body
      %s23 = ssub.s32 %s18, 1
      %s24 = ssub.s32 %s18, 2
      %s31 = sadd.s32 1, %s26
      %p32 = scmp.ge.s32.totalorder %s31, 4
      %s33 = scalar_select %p32, 0, %s31
      %s34 = sadd.s32 1, %s25
      %s35 = scalar_select %p32, %s34, %s25
      %p36 = scmp.ge.s32.totalorder %s35, 2
      %s37 = scalar_select %p36, 0, %s35
      %s38 = ssub.s32 %s25, %s37
      %p39 = scmp.eq.s32.totalorder %s38, 0
      %s41 = sadd.s32 %s40, 1
      %s42 = scalar_select %p39, %s40, %s41
      %p45 = pneg %p39
      %p46 = scmp.eq.s32.totalorder %s18, 7
      %p47 = por %p45, %p46
      %p48 = scmp.ne.s32.totalorder %s40, %s43
      %p49 = scmp.eq.s32.totalorder %s18, 0
      %p50 = por %p48, %p49
      %p51 = scmp.ne.s32.totalorder %s40, %s43
      %p52 = scmp.eq.s32.totalorder %s23, 7
      %p53 = por %p51, %p52
      %p54 = scmp.ne.s32.totalorder %s43, %s44
      %p55 = scmp.eq.s32.totalorder %s23, 0
      %p56 = por %p54, %p55
      %p57 = scmp.ne.s32.totalorder %s43, %s44
      %p58 = scmp.eq.s32.totalorder %s24, 7
      %p59 = por %p57, %p58
      %p61 = scmp.ne.s32.totalorder %s44, %s60
      %p62 = scmp.eq.s32.totalorder %s24, 0
      %p63 = por %p61, %p62
      %s64 = ssub.s32 %s26, %s33
      %p65 = scmp.eq.s32.totalorder %s64, 0
      %s67 = sadd.s32 %s66, 1
      %s68 = scalar_select %p65, %s66, %s67
      %p71 = pneg %p65
      %p72 = scmp.eq.s32.totalorder %s18, 7
      %p73 = por %p71, %p72
      %p74 = scmp.ne.s32.totalorder %s66, %s69
      %p75 = scmp.eq.s32.totalorder %s18, 0
      %p76 = por %p74, %p75
      %p77 = scmp.ne.s32.totalorder %s66, %s69
      %p78 = scmp.eq.s32.totalorder %s23, 7
      %p79 = por %p77, %p78
      %p80 = scmp.ne.s32.totalorder %s69, %s70
      %p81 = scmp.eq.s32.totalorder %s23, 0
      %p82 = por %p80, %p81
      %p83 = scmp.ne.s32.totalorder %s69, %s70
      %p84 = scmp.eq.s32.totalorder %s24, 7
      %p85 = por %p83, %p84
      %p87 = scmp.ne.s32.totalorder %s70, %s86
      %p88 = scmp.eq.s32.totalorder %s24, 0
      %p89 = por %p87, %p88
      %s90 = ssub.s32 %s26, %s33
      %p91 = scmp.eq.s32.totalorder %s90, 0
      %s93 = sadd.s32 %s92, 1
      %s94 = scalar_select %p91, %s92, %s93
      %p97 = pneg %p91
      %p98 = scmp.eq.s32.totalorder %s18, 7
      %p99 = por %p97, %p98
      %p100 = scmp.ne.s32.totalorder %s92, %s95
      %p101 = scmp.eq.s32.totalorder %s18, 0
      %p102 = por %p100, %p101
      %p103 = scmp.ne.s32.totalorder %s92, %s95
      %p104 = scmp.eq.s32.totalorder %s23, 7
      %p105 = por %p103, %p104
      %p106 = scmp.ne.s32.totalorder %s95, %s96
      %p107 = scmp.eq.s32.totalorder %s23, 0
      %p108 = por %p106, %p107
      %p109 = scmp.ne.s32.totalorder %s95, %s96
      %p110 = scmp.eq.s32.totalorder %s24, 7
      %p111 = por %p109, %p110
      %p113 = scmp.ne.s32.totalorder %s96, %s112
      %p114 = scmp.eq.s32.totalorder %s24, 0
      %p115 = por %p113, %p114
      %s116 = ssub.s32 %s25, %s37
      %p117 = scmp.eq.s32.totalorder %s116, 0
      %s119 = sadd.s32 %s118, 1
      %s120 = scalar_select %p117, %s118, %s119
      %p123 = pneg %p117
      %p124 = scmp.eq.s32.totalorder %s18, 7
      %p125 = por %p123, %p124
      %p126 = scmp.ne.s32.totalorder %s118, %s121
      %p127 = scmp.eq.s32.totalorder %s18, 0
      %p128 = por %p126, %p127
      %p129 = scmp.ne.s32.totalorder %s118, %s121
      %p130 = scmp.eq.s32.totalorder %s23, 7
      %p131 = por %p129, %p130
      %p132 = scmp.ne.s32.totalorder %s121, %s122
      %p133 = scmp.eq.s32.totalorder %s23, 0
      %p134 = por %p132, %p133
      %p135 = scmp.ne.s32.totalorder %s121, %s122
      %p136 = scmp.eq.s32.totalorder %s24, 7
      %p137 = por %p135, %p136
      %p139 = scmp.ne.s32.totalorder %s122, %s138
      %p140 = scmp.eq.s32.totalorder %s24, 0
      %p141 = por %p139, %p140
      %p142 = scmp.le.s32.totalorder 1, %s18
      %p143 = scmp.lt.s32.totalorder %s18, 9
      %p144 = pnand %p142, %p143
      %p145 = pneg %p144
      // Predicated region
      $region9: #{tpu_custom_call.1} parent=5 // pred_check
        _
      $region10: #{tpu_custom_call.1} parent=5 // pred_check_branch
        %147 = sbr.rel (%p144) target = $region12
      $region11: #{tpu_custom_call.1} parent=5 // pred_region
        %s148 = ssub.s32 %s18, 1
      $region12: #{tpu_custom_call.1} parent=5 // pred_fallthru
        _
      %p149 = scmp.lt.s32.totalorder %s18, 8
      // Predicated region
      $region13: #{tpu_custom_call.1} parent=5 // pred_check
        %p150 = pneg %p149
      $region14: #{tpu_custom_call.1} parent=5 // pred_check_branch
        %152 = sbr.rel (%p150) target = $region16
      $region15: #{tpu_custom_call.1} parent=5 // pred_region
        // Predicated region
        $region17: #{tpu_custom_call.1} parent=15 // pred_check
          %p153 = pneg %p50
        $region18: #{tpu_custom_call.1} parent=15 // pred_check_branch
          %155 = sbr.rel (%p153) target = $region20
        $region19: #{tpu_custom_call.1} parent=15 // pred_region
          %s156 = sand.u32 %s40, 1
          %s157 = scalar_lea.sflag [#allocation5], %s156
          %s158 = sand.u32 %s40, 1
          %s159 = smul.addr %s158, 4
          %s160 = scalar_lea.vmem [#allocation4], %s159
          %s162 = ssub.s32 64, 64
          %163 = vsyncadd %s157, %s162
          %s164 = smul.addr %s25, 64
          %s165 = scalar_lea.hbm %s0, %s164
          %s167 = sshll.u32 %s160, 4
          %s168 = int_to_ptr.vmem [resolvable:$true] %s167
          %170 = dma.hbm_to_vmem [thread:$0]  %s165, 64, %s168, %s157
        $region20: #{tpu_custom_call.1} parent=15 // pred_fallthru
          _
        // Predicated region
        $region21: #{tpu_custom_call.1} parent=15 // pred_check
          %p171 = pneg %p76
        $region22: #{tpu_custom_call.1} parent=15 // pred_check_branch
          %173 = sbr.rel (%p171) target = $region24
        $region23: #{tpu_custom_call.1} parent=15 // pred_region
          %s174 = sand.u32 %s18, 1
          %s175 = scalar_lea.sflag [#allocation8], %s174
          %s176 = sand.u32 %s66, 1
          %s177 = smul.addr %s176, 32
          %s178 = scalar_lea.vmem [#allocation7], %s177
          %s180 = ssub.s32 512, 512
          %181 = vsyncadd %s175, %s180
          %s182 = smul.addr %s26, 64
          %s183 = scalar_lea.hbm %s1, %s182
          %s184 = sshll.u32 %s178, 4
          %s185 = int_to_ptr.vmem [resolvable:$true] %s184
          %190 = dma.hbm_to_vmem [thread:$0]  %s183, 512, %s185, %s175, 256, 64, 4
        $region24: #{tpu_custom_call.1} parent=15 // pred_fallthru
          _
        // Predicated region
        $region25: #{tpu_custom_call.1} parent=15 // pred_check
          %p191 = pneg %p102
        $region26: #{tpu_custom_call.1} parent=15 // pred_check_branch
          %193 = sbr.rel (%p191) target = $region28
        $region27: #{tpu_custom_call.1} parent=15 // pred_region
          %s194 = sand.u32 %s18, 1
          %s195 = scalar_lea.sflag [#allocation8], %s194
          %s196 = sand.u32 %s92, 1
          %s197 = scalar_lea.vmem [#allocation9], %s196
          %s199 = ssub.s32 16, 16
          %200 = vsyncadd %s195, %s199
          %s201 = smul.addr %s26, 16
          %s202 = scalar_lea.hbm %s2, %s201
          %s204 = sshll.u32 %s197, 4
          %s205 = int_to_ptr.vmem [resolvable:$true] %s204
          %207 = dma.hbm_to_vmem [thread:$0]  %s202, 16, %s205, %s195
        $region28: #{tpu_custom_call.1} parent=15 // pred_fallthru
          _
      $region16: #{tpu_custom_call.1} parent=5 // pred_fallthru
        _
      %p208 = scmp.le.s32.totalorder 1, %s18
      %p209 = scmp.lt.s32.totalorder %s18, 9
      %p210 = pnand %p208, %p209
      %p211 = pneg %p210
      // Predicated region
      $region29: #{tpu_custom_call.1} parent=5 // pred_check
        _
      $region30: #{tpu_custom_call.1} parent=5 // pred_check_branch
        %213 = sbr.rel (%p210) target = $region32
      $region31: #{tpu_custom_call.1} parent=5 // pred_region
        %s214 = ssub.s32 %s18, 1
        %s215 = sand.u32 %s43, 1
        %s216 = scalar_lea.sflag [#allocation5], %s215
        %s217 = sand.u32 %s43, 1
        %s218 = smul.addr %s217, 4
        %s219 = scalar_lea.vmem [#allocation4], %s218
        // Predicated region
        $region33: #{tpu_custom_call.1} parent=31 // pred_check
          %p220 = pneg %p56
        $region34: #{tpu_custom_call.1} parent=31 // pred_check_branch
          %222 = sbr.rel (%p220) target = $region36
        $region35: #{tpu_custom_call.1} parent=31 // pred_region
          %223 = dma.done %s216, 64
        $region36: #{tpu_custom_call.1} parent=31 // pred_fallthru
          _
        %s224 = sand.u32 %s23, 1
        %s225 = scalar_lea.sflag [#allocation8], %s224
        %s226 = sand.u32 %s69, 1
        %s227 = smul.addr %s226, 32
        %s228 = scalar_lea.vmem [#allocation7], %s227
        // Predicated region
        $region37: #{tpu_custom_call.1} parent=31 // pred_check
          %p229 = pneg %p82
        $region38: #{tpu_custom_call.1} parent=31 // pred_check_branch
          %231 = sbr.rel (%p229) target = $region40
        $region39: #{tpu_custom_call.1} parent=31 // pred_region
          %232 = dma.done %s225, 512
        $region40: #{tpu_custom_call.1} parent=31 // pred_fallthru
          _
        %s233 = sand.u32 %s23, 1
        %s234 = scalar_lea.sflag [#allocation8], %s233
        %s235 = sand.u32 %s95, 1
        %s236 = scalar_lea.vmem [#allocation9], %s235
        // Predicated region
        $region41: #{tpu_custom_call.1} parent=31 // pred_check
          %p237 = pneg %p108
        $region42: #{tpu_custom_call.1} parent=31 // pred_check_branch
          %239 = sbr.rel (%p237) target = $region44
        $region43: #{tpu_custom_call.1} parent=31 // pred_region
          %240 = dma.done %s234, 16
        $region44: #{tpu_custom_call.1} parent=31 // pred_fallthru
          _
        %s241 = sand.u32 %s43, 1
        %s242 = scalar_lea.sflag [#allocation5], %s241
        %s243 = sand.u32 %s43, 1
        %s244 = smul.addr %s243, 4
        %s245 = scalar_lea.vmem [#allocation4], %s244
        %p246 = pneg %p56
        %p247 = pneg %p53
        %s248 = sand.u32 %s23, 1
        %s249 = scalar_lea.sflag [#allocation8], %s248
        %s250 = sand.u32 %s69, 1
        %s251 = smul.addr %s250, 32
        %s252 = scalar_lea.vmem [#allocation7], %s251
        %p253 = pneg %p82
        %p254 = pneg %p79
        %s255 = sand.u32 %s23, 1
        %s256 = scalar_lea.sflag [#allocation8], %s255
        %s257 = sand.u32 %s95, 1
        %s258 = scalar_lea.vmem [#allocation9], %s257
        %p259 = pneg %p108
        %p260 = pneg %p105
        %p261 = pneg %p134
        %p262 = pneg %p131
        %s263 = sand.u32 %s121, 1
        %s264 = scalar_lea.sflag [#allocation6], %s263
        %s265 = sand.u32 %s121, 1
        %s266 = smul.addr %s265, 24
        %s267 = scalar_lea.vmem [#allocation10], %s266
        %p269 = scmp.eq.s32.totalorder %s28, 0
        // Predicated region
        $region45: #{tpu_custom_call.1} parent=31 // pred_check
          %p270 = pneg %p269
        $region46: #{tpu_custom_call.1} parent=31 // pred_check_branch
          %272 = sbr.rel (%p270) target = $region48
        $region47: #{tpu_custom_call.1} parent=31 // pred_region
          %273 = vst [vmem:[#allocation2] sm:$0xff] -inf
          %274 = vst [vmem:[#allocation3] sm:$0xff] 0
        $region48: #{tpu_custom_call.1} parent=31 // pred_fallthru
          _
        %v275 = vld [vmem:[%s219] sm:$0xf]
        %v276 = vld [vmem:[%s228] sm:$0xf]
        %v277 = vld [vmem:[%s228 + $0x4] sm:$0xf]
        %v278 = vld [vmem:[%s228 + $0x8] sm:$0xf]
        %v279 = vld [vmem:[%s228 + $0xc] sm:$0xf]
        %v280 = vld [vmem:[%s228 + $0x10] sm:$0xf]
        %v281 = vld [vmem:[%s228 + $0x14] sm:$0xf]
        %v282 = vld [vmem:[%s228 + $0x18] sm:$0xf]
        %v283 = vld [vmem:[%s228 + $0x1c] sm:$0xf]
        %v292 = vunpack.c.l.b16 %v276
        %v293 = vunpack.c.l.b16 %v277
        %v294 = vunpack.c.l.b16 %v278
        %v295 = vunpack.c.l.b16 %v279
        %v296 = vunpack.c.l.b16 %v280
        %v297 = vunpack.c.l.b16 %v281
        %v298 = vunpack.c.l.b16 %v282
        %v299 = vunpack.c.l.b16 %v283
        %v300 = vpack.c.b16 %v293, %v292
        %v301 = vpack.c.b16 %v295, %v294
        %v302 = vpack.c.b16 %v297, %v296
        %v303 = vpack.c.b16 %v299, %v298
        %vm308 = vcmask 523264
        %v310 = vsel %vm308, %v275, 0
        %312 = vmatprep.subr.bf16.mxu0 0
        %313 = vmatpush1.bf16.msra.mxu0 0
        %314 = vmatprep.subr.bf16.mxu0 0
        %315 = vmatpush1.bf16.msra.mxu0 0
        %316 = vmatprep.subr.bf16.mxu0 0
        %317 = vmatpush1.bf16.msra.mxu0 0
        %318 = vmatprep.subr.bf16.mxu0 0
        %319 = vmatpush1.bf16.msra.mxu0 0
        %320 = vmatprep.subr.bf16.mxu0 0
        %321 = vmatpush1.bf16.msra.mxu0 %v303
        %322 = vmatprep.subr.bf16.mxu0 0
        %323 = vmatpush1.bf16.msra.mxu0 %v302
        %324 = vmatprep.subr.bf16.mxu0 0
        %325 = vmatpush1.bf16.msra.mxu0 %v301
        %326 = vmatprep.subr.bf16.mxu0 0
        %327 = vmatpush1.bf16.msra.mxu0 %v300
        %328 = vmatprep.subr.bf16.mxu0 0
        %329 = vmatpush2.bf16.msra.mxu0 0
        %330 = vmatprep.subr.bf16.mxu0 0
        %331 = vmatpush2.bf16.msra.mxu0 0
        %332 = vmatprep.subr.bf16.mxu0 0
        %333 = vmatpush2.bf16.msra.mxu0 0
        %334 = vmatprep.subr.bf16.mxu0 0
        %335 = vmatpush2.bf16.msra.mxu0 0
        %336 = vmatprep.subr.bf16.mxu0 0
        %337 = vmatpush2.bf16.msra.mxu0 0
        %338 = vmatprep.subr.bf16.mxu0 0
        %339 = vmatpush2.bf16.msra.mxu0 0
        %340 = vmatprep.subr.bf16.mxu0 0
        %341 = vmatpush2.bf16.msra.mxu0 0
        %342 = vmatprep.subr.bf16.mxu0 0
        %343 = vmatpush2.bf16.msra.mxu0 0
        %344 = vmatprep.mubr.bf16.mxu0 0
        %345 = vmatmul.mubr.bf16.gmra.mxu0 %v310
        %v346 = vpop.f32.mrf.mxu0
        %v347 = vadd.f32 0.0, %v346
        %v348 = vpop.f32.mrf.mxu0
        %v349 = vpop.f32.mrf.mxu0
        %v350 = vpop.f32.mrf.mxu0
        %351 = vdwg.mxu0
        %v352 = vlaneseq
        %v353 = vand.u32 %v352, 127
        %v354 = vadd.s32 %v353, 128
        %v355 = vmul.u32 %v354, 128
        %v356 = vld [vmem:[%s236] sm:$0x1]
        %v357 = vadd.s32 %v355, %v356
        %v358 = vlaneseq
        %v359 = vshrl.u32 %v358, 7
        %v360 = vsub.s32 0, %v359
        %v361 = vrot.slane %v357, %v360
        %v362 = vld [vmem:[#allocation2] sm:$0xff]
        %v363 = vld [vmem:[#allocation3] sm:$0xff]
        %v364 = vmax.f32 %v362, %v347
        %365 = vmax.xlane.f32.xlu0 %v364
        %v366 = vpop.xlane.xlu0 %365
        %vm367 = vcmp.eq.f32.partialorder %v362, %v366
        %vm368 = vcmp.eq.f32.partialorder %v347, %v366
        %v369 = vsel %vm367, %v363, 2147483647
        %v370 = vsel %vm368, %v361, 2147483647
        %vm371 = vcmp.lt.s32.totalorder %v369, %v370
        %v372 = vsel %vm371, %v369, %v370
        %v373 = vand.u32 %v372, 65535
        %v374 = vshra.s32 %v372, 16
        %v375 = vcvt.s32.f32 %v373
        %v376 = vcvt.s32.f32 %v374
        %377 = vmin.xlane.f32.xlu0 %v376
        %v378 = vpop.xlane.xlu0 %377
        %vm379 = vcmp.eq.f32.partialorder %v376, %v378
        %v380 = vsel %vm379, %v375, inf
        %381 = vmin.xlane.f32.xlu0 %v380
        %v382 = vpop.xlane.xlu0 %381
        %v383 = vcvt.f32.s32 %v382
        %v384 = vcvt.f32.s32 %v378
        %v385 = vshll.u32 %v384, 16
        %v386 = vadd.s32 %v385, %v383
        %v387 = vand.u32 %v386, 127
        %vm388 = vcmask 7168
        %389 = vst.msk [vmem:[#allocation2] sm:$0xff] %vm388, %v366
        %390 = vst.msk [vmem:[#allocation3] sm:$0xff] %vm388, %v387
        %vm391 = vcmp.eq.s32.totalorder %v363, %v386
        %vm392 = vcmp.eq.s32.totalorder %v361, %v386
        %v393 = vsel %vm391, -inf, %v362
        %v394 = vsel %vm392, -inf, %v347
        %v395 = vmax.f32 %v393, %v394
        %396 = vmax.xlane.f32.xlu0 %v395
        %v397 = vpop.xlane.xlu0 %396
        %vm398 = vcmp.eq.f32.partialorder %v393, %v397
        %vm399 = vcmp.eq.f32.partialorder %v394, %v397
        %v400 = vsel %vm398, %v363, 2147483647
        %v401 = vsel %vm399, %v361, 2147483647
        %vm402 = vcmp.lt.s32.totalorder %v400, %v401
        %v403 = vsel %vm402, %v400, %v401
        %v404 = vand.u32 %v403, 65535
        %v405 = vshra.s32 %v403, 16
        %v406 = vcvt.s32.f32 %v404
        %v407 = vcvt.s32.f32 %v405
        %408 = vmin.xlane.f32.xlu0 %v407
        %v409 = vpop.xlane.xlu0 %408
        %vm410 = vcmp.eq.f32.partialorder %v407, %v409
        %v411 = vsel %vm410, %v406, inf
        %412 = vmin.xlane.f32.xlu0 %v411
        %v413 = vpop.xlane.xlu0 %412
        %v414 = vcvt.f32.s32 %v413
        %v415 = vcvt.f32.s32 %v409
        %v416 = vshll.u32 %v415, 16
        %v417 = vadd.s32 %v416, %v414
        %v418 = vand.u32 %v417, 127
        %vm419 = vcmask 15368
        %420 = vst.msk [vmem:[#allocation2] sm:$0xff] %vm419, %v397
        %v421 = vadd.s32 %v418, 128
        %422 = vst.msk [vmem:[#allocation3] sm:$0xff] %vm419, %v421
        %vm423 = vcmp.eq.s32.totalorder %v363, %v417
        %vm424 = vcmp.eq.s32.totalorder %v361, %v417
        %v425 = vsel %vm423, -inf, %v393
        %v426 = vsel %vm424, -inf, %v394
        %v427 = vmax.f32 %v425, %v426
        %428 = vmax.xlane.f32.xlu0 %v427
        %v429 = vpop.xlane.xlu0 %428
        %vm430 = vcmp.eq.f32.partialorder %v425, %v429
        %vm431 = vcmp.eq.f32.partialorder %v426, %v429
        %v432 = vsel %vm430, %v363, 2147483647
        %v433 = vsel %vm431, %v361, 2147483647
        %vm434 = vcmp.lt.s32.totalorder %v432, %v433
        %v435 = vsel %vm434, %v432, %v433
        %v436 = vand.u32 %v435, 65535
        %v437 = vshra.s32 %v435, 16
        %v438 = vcvt.s32.f32 %v436
        %v439 = vcvt.s32.f32 %v437
        %440 = vmin.xlane.f32.xlu0 %v439
        %v441 = vpop.xlane.xlu0 %440
        %vm442 = vcmp.eq.f32.partialorder %v439, %v441
        %v443 = vsel %vm442, %v438, inf
        %444 = vmin.xlane.f32.xlu0 %v443
        %v445 = vpop.xlane.xlu0 %444
        %v446 = vcvt.f32.s32 %v445
        %v447 = vcvt.f32.s32 %v441
        %v448 = vshll.u32 %v447, 16
        %v449 = vadd.s32 %v448, %v446
        %v450 = vand.u32 %v449, 127
        %vm451 = vcmask 23568
        %452 = vst.msk [vmem:[#allocation2] sm:$0xff] %vm451, %v429
        %v453 = vadd.s32 %v450, 256
        %454 = vst.msk [vmem:[#allocation3] sm:$0xff] %vm451, %v453
        %vm455 = vcmp.eq.s32.totalorder %v363, %v449
        %vm456 = vcmp.eq.s32.totalorder %v361, %v449
        %v457 = vsel %vm455, -inf, %v425
        %v458 = vsel %vm456, -inf, %v426
        %v459 = vmax.f32 %v457, %v458
        %460 = vmax.xlane.f32.xlu0 %v459
        %v461 = vpop.xlane.xlu0 %460
        %vm462 = vcmp.eq.f32.partialorder %v457, %v461
        %vm463 = vcmp.eq.f32.partialorder %v458, %v461
        %v464 = vsel %vm462, %v363, 2147483647
        %v465 = vsel %vm463, %v361, 2147483647
        %vm466 = vcmp.lt.s32.totalorder %v464, %v465
        %v467 = vsel %vm466, %v464, %v465
        %v468 = vand.u32 %v467, 65535
        %v469 = vshra.s32 %v467, 16
        %v470 = vcvt.s32.f32 %v468
        %v471 = vcvt.s32.f32 %v469
        %472 = vmin.xlane.f32.xlu0 %v471
        %v473 = vpop.xlane.xlu0 %472
        %vm474 = vcmp.eq.f32.partialorder %v471, %v473
        %v475 = vsel %vm474, %v470, inf
        %476 = vmin.xlane.f32.xlu0 %v475
        %v477 = vpop.xlane.xlu0 %476
        %v478 = vcvt.f32.s32 %v477
        %v479 = vcvt.f32.s32 %v473
        %v480 = vshll.u32 %v479, 16
        %v481 = vadd.s32 %v480, %v478
        %v482 = vand.u32 %v481, 127
        %vm483 = vcmask 31768
        %484 = vst.msk [vmem:[#allocation2] sm:$0xff] %vm483, %v461
        %v485 = vadd.s32 %v482, 384
        %486 = vst.msk [vmem:[#allocation3] sm:$0xff] %vm483, %v485
        %vm487 = vcmp.eq.s32.totalorder %v363, %v481
        %vm488 = vcmp.eq.s32.totalorder %v361, %v481
        %v489 = vsel %vm487, -inf, %v457
        %v490 = vsel %vm488, -inf, %v458
        %v491 = vmax.f32 %v489, %v490
        %492 = vmax.xlane.f32.xlu0 %v491
        %v493 = vpop.xlane.xlu0 %492
        %vm494 = vcmp.eq.f32.partialorder %v489, %v493
        %vm495 = vcmp.eq.f32.partialorder %v490, %v493
        %v496 = vsel %vm494, %v363, 2147483647
        %v497 = vsel %vm495, %v361, 2147483647
        %vm498 = vcmp.lt.s32.totalorder %v496, %v497
        %v499 = vsel %vm498, %v496, %v497
        %v500 = vand.u32 %v499, 65535
        %v501 = vshra.s32 %v499, 16
        %v502 = vcvt.s32.f32 %v500
        %v503 = vcvt.s32.f32 %v501
        %504 = vmin.xlane.f32.xlu0 %v503
        %v505 = vpop.xlane.xlu0 %504
        %vm506 = vcmp.eq.f32.partialorder %v503, %v505
        %v507 = vsel %vm506, %v502, inf
        %508 = vmin.xlane.f32.xlu0 %v507
        %v509 = vpop.xlane.xlu0 %508
        %v510 = vcvt.f32.s32 %v509
        %v511 = vcvt.f32.s32 %v505
        %v512 = vshll.u32 %v511, 16
        %v513 = vadd.s32 %v512, %v510
        %v514 = vand.u32 %v513, 127
        %vm515 = vcmask 39968
        %516 = vst.msk [vmem:[#allocation2] sm:$0xff] %vm515, %v493
        %v517 = vadd.s32 %v514, 512
        %518 = vst.msk [vmem:[#allocation3] sm:$0xff] %vm515, %v517
        %p519 = scmp.eq.s32.totalorder %s28, 3
        // Predicated region
        $region49: #{tpu_custom_call.1} parent=31 // pred_check
          %p520 = pneg %p519
        $region50: #{tpu_custom_call.1} parent=31 // pred_check_branch
          %522 = sbr.rel (%p520) target = $region52
        $region51: #{tpu_custom_call.1} parent=31 // pred_region
          %v523 = vsub.f32 %v366, %v366
          %v524 = vmul.f32 %v523, 10.0
          %v525 = vmul.f32 %v524, 1.442695
          %v526 = vpow.pop %v525
          %v527 = vsub.f32 %v397, %v366
          %v528 = vmul.f32 %v527, 10.0
          %v529 = vmul.f32 %v528, 1.442695
          %v530 = vpow.pop %v529
          %v531 = vsub.f32 %v429, %v366
          %v532 = vmul.f32 %v531, 10.0
          %v533 = vmul.f32 %v532, 1.442695
          %v534 = vpow.pop %v533
          %v535 = vsub.f32 %v461, %v366
          %v536 = vmul.f32 %v535, 10.0
          %v537 = vmul.f32 %v536, 1.442695
          %v538 = vpow.pop %v537
          %v539 = vsub.f32 %v493, %v366
          %v540 = vmul.f32 %v539, 10.0
          %v541 = vmul.f32 %v540, 1.442695
          %v542 = vpow.pop %v541
          %v543 = vadd.f32 %v526, %v530
          %v544 = vadd.f32 %v543, %v534
          %v545 = vadd.f32 %v544, %v538
          %v546 = vadd.f32 %v545, %v542
          %v547 = vrcp.pop %v546
          %v548 = vmul.f32 %v526, %v547
          %vm549 = vcmp.eq.s32.totalorder %v353, %v387
          %v550 = vsel %vm549, 1, 0
          %v551 = vcvt.s32.f32 %v550
          %v552 = vmul.f32 %v548, %v551
          %v553 = vadd.f32 %v552, 0.0
          %554 = vst [vmem:[%s267] sm:$0xff] %v553
          %v555 = vmul.f32 %v530, %v547
          %vm556 = vcmp.eq.s32.totalorder %v353, %v418
          %v557 = vsel %vm556, 1, 0
          %v558 = vcvt.s32.f32 %v557
          %v559 = vmul.f32 %v555, %v558
          %v560 = vadd.f32 %v553, %v559
          %v561 = vmul.f32 %v534, %v547
          %vm562 = vcmp.eq.s32.totalorder %v353, %v450
          %v563 = vsel %vm562, 1, 0
          %v564 = vcvt.s32.f32 %v563
          %v565 = vmul.f32 %v561, %v564
          %v566 = vadd.f32 %v560, %v565
          %s567 = scalar_lea.vmem %s267, 8 [#allocation10]
          %568 = vst [vmem:[%s567] sm:$0xff] %v566
          %v569 = vmul.f32 %v538, %v547
          %vm570 = vcmp.eq.s32.totalorder %v353, %v482
          %v571 = vsel %vm570, 1, 0
          %v572 = vcvt.s32.f32 %v571
          %v573 = vmul.f32 %v569, %v572
          %v574 = vadd.f32 %v566, %v573
          %v575 = vmul.f32 %v542, %v547
          %vm576 = vcmp.eq.s32.totalorder %v353, %v514
          %v577 = vsel %vm576, 1, 0
          %v578 = vcvt.s32.f32 %v577
          %v579 = vmul.f32 %v575, %v578
          %v580 = vadd.f32 %v574, %v579
          %s581 = scalar_lea.vmem %s267, 16 [#allocation10]
          %582 = vst [vmem:[%s581] sm:$0xff] %v580
        $region52: #{tpu_custom_call.1} parent=31 // pred_fallthru
          _
        %s583 = sand.u32 %s121, 1
        %s584 = scalar_lea.sflag [#allocation6], %s583
        %s585 = sand.u32 %s121, 1
        %s586 = smul.addr %s585, 24
        %s587 = scalar_lea.vmem [#allocation10], %s586
        // Predicated region
        $region53: #{tpu_custom_call.1} parent=31 // pred_check
          %p588 = pneg %p131
        $region54: #{tpu_custom_call.1} parent=31 // pred_check_branch
          %590 = sbr.rel (%p588) target = $region56
        $region55: #{tpu_custom_call.1} parent=31 // pred_region
          %s592 = ssub.s32 384, 384
          %593 = vsyncadd %s584, %s592
          %s594 = smul.addr %s27, 128
          %s595 = scalar_lea.hbm %s3, %s594
          %s596 = sshll.u32 %s587, 4
          %s597 = int_to_ptr.vmem [resolvable:$true] %s596
          %602 = dma.vmem_to_hbm [thread:$0]  %s597, 384, %s595, %s584, 128, 256, 8
        $region56: #{tpu_custom_call.1} parent=31 // pred_fallthru
          _
      $region32: #{tpu_custom_call.1} parent=5 // pred_fallthru
        _
      %p603 = scmp.le.s32.totalorder 2, %s18
      // Predicated region
      $region57: #{tpu_custom_call.1} parent=5 // pred_check
        %p604 = pneg %p603
      $region58: #{tpu_custom_call.1} parent=5 // pred_check_branch
        %606 = sbr.rel (%p604) target = $region60
      $region59: #{tpu_custom_call.1} parent=5 // pred_region
        %s607 = ssub.s32 %s18, 2
        // Predicated region
        $region61: #{tpu_custom_call.1} parent=59 // pred_check
          %p608 = pneg %p137
        $region62: #{tpu_custom_call.1} parent=59 // pred_check_branch
          %610 = sbr.rel (%p608) target = $region64
        $region63: #{tpu_custom_call.1} parent=59 // pred_region
          %s611 = sand.u32 %s122, 1
          %s612 = scalar_lea.sflag [#allocation6], %s611
          %s613 = sand.u32 %s122, 1
          %s614 = smul.addr %s613, 24
          %s615 = scalar_lea.vmem [#allocation10], %s614
          %616 = dma.done %s612, 384
        $region64: #{tpu_custom_call.1} parent=59 // pred_fallthru
          _
      $region60: #{tpu_custom_call.1} parent=5 // pred_fallthru
        _
    $region6: #{tpu_custom_call.1} parent=1 // loop_footer
      %s22 = sadd.s32 1, %s18
    $region7: #{tpu_custom_call.1} parent=1 // loop_footer_branch
      %17 = sbr.rel target = $region3
    $region8: #{tpu_custom_call.1} parent=1 // loop_exit
      _
    %617 = vsyncpa [#allocation5], 1
    %s618 = scalar_lea.sflag [#allocation5], 1
    %619 = vsyncpa %s618, 1
    %620 = vsyncpa [#allocation8], 1
    %s621 = scalar_lea.sflag [#allocation8], 1
    %622 = vsyncpa %s621, 1
    %623 = vsyncpa [#allocation6], 1
    %s624 = scalar_lea.sflag [#allocation6], 1
    %625 = vsyncpa %s624, 1

</llo_original>
